<compile_context>
chip_gen: v7x
topology: tpu7x:2x2x1
jax: 0.10.0
libtpu: 0.0.40
codegen_flags: <defaults>
</compile_context>

<pallas_src>
import math

import jax
import jax.numpy as jnp
from jax.experimental import pallas as pl
from jax.experimental.pallas import tpu as pltpu

_MIB = 1024 * 1024


def _round_up(x, m):
    return ((x + m - 1) // m) * m


def _swooshl_f32(x):
    # SwooshL(x) = logaddexp(0, x - 4) - 0.08*x - 0.035
    z = x - 4.0
    return jnp.maximum(z, 0.0) + jnp.log1p(jnp.exp(-jnp.abs(z))) - 0.08 * x - 0.035


def _pad_cout(cout):
    # Lane-dense (128) and v6e/v7x MXU-width (256) friendly output padding.
    if cout <= 128:
        return 128
    return _round_up(cout, 256)


def _vmem_budgets():
    """(usable vmem budget, resident-weight threshold) per TPU generation."""
    try:
        cap = int(pltpu.get_tpu_info().vmem_capacity_bytes)
    except Exception:
        cap = 64 * _MIB
    if cap <= 64 * _MIB:                # v7x-class: 64 MiB per TensorCore
        return 44 * _MIB, 18 * _MIB
    return 96 * _MIB, 44 * _MIB         # v5e / v6e: 128 MiB VMEM


# ----------------------------- kernels ----------------------------------------

def _kernel_resident(x_ref, w_ref, bias_ref, o_ref):
    # x_ref:    (tm, Cin)      native dtype input tile
    # w_ref:    (Cin, Cout_p)  bf16 merged weight (constant block index -> resident)
    # bias_ref: (1, Cout_p)    f32
    # o_ref:    (tm, Cout_p)
    act = _swooshl_f32(x_ref[...].astype(jnp.float32)).astype(jnp.bfloat16)
    # Dropout3 with p == 0 / eval mode is identity.
    # TODO(synk): training-mode Dropout3 (shared-dim random mask + 1/(1-p) scale) is
    # stochastic and not part of the deterministic forward implemented here.
    out = jnp.dot(act, w_ref[...], preferred_element_type=jnp.float32)
    o_ref[...] = (out + bias_ref[...]).astype(o_ref.dtype)


def _kernel_streamed(x_ref, w_ref, bias_ref, o_ref, act_ref):
    # Weight streamed over the Cout axis (j); the bf16 SwooshL activation is
    # computed once per row tile (j == 0) and cached in VMEM scratch.
    @pl.when(pl.program_id(1) == 0)
    def _():
        act_ref[...] = _swooshl_f32(x_ref[...].astype(jnp.float32)).astype(jnp.bfloat16)

    out = jnp.dot(act_ref[...], w_ref[...], preferred_element_type=jnp.float32)
    o_ref[...] = (out + bias_ref[...]).astype(o_ref.dtype)


# ----------------------------- wrapper -----------------------------------------

def prepare_merged_params(weight, bias, lora_A, lora_B, *, lora_alpha=1, r=0):
    """One-off (per weight update) parameter prep, hoisted out of the forward path.

    Folds LoRA into the main weight in f32 (W_eff = W + (alpha/r) * B @ A -- exactly
    what the PyTorch module does in eval() with merge_weights=True), transposes,
    pads Cout to a lane/MXU-friendly width and casts to bf16.

    Returns (w_bf16 (Cin, Cout_p), bias_f32 (1, Cout_p), Cout).
    """
    cout, cin = weight.shape
    w_eff = weight.astype(jnp.float32)
    if r > 0:
        scaling = float(lora_alpha) / float(r)
        # NOTE: merging + bf16 cast can drop LoRA deltas much smaller than |W|
        # (bf16 ~2^-8 relative resolution); acceptable here since it matches the
        # module's own merged eval path.
        w_eff = w_eff + (lora_B.astype(jnp.float32)
                         @ lora_A.astype(jnp.float32)) * scaling
    w_t = w_eff.T                                           # (Cin, Cout)
    if bias is not None:
        bias2d = bias.astype(jnp.float32).reshape(1, cout)
    else:
        bias2d = jnp.zeros((1, cout), jnp.float32)
    cout_p = _pad_cout(cout)
    if cout_p != cout:
        w_t = jnp.pad(w_t, ((0, 0), (0, cout_p - cout)))
        bias2d = jnp.pad(bias2d, ((0, 0), (0, cout_p - cout)))
    return w_t.astype(jnp.bfloat16), bias2d, cout


def _make_weight_spec(cin, tn, streamed):
    idx = lambda i, j: (0, j)
    if streamed:
        try:
            return pl.BlockSpec((cin, tn), idx, pipeline_mode=pl.Buffered(3))
        except TypeError:
            pass
    return pl.BlockSpec((cin, tn), idx)


def activation_dropout_linear_lora(x, weight=None, bias=None, lora_A=None, lora_B=None,
                                   *, lora_alpha=1, r=0, prepared=None,
                                   tm=512, tn=256, force_streamed=False,
                                   vmem_limit_bytes=None):
    """Forward of ActivationDropoutAndLinear_lora (eval / dropout_p == 0 path).

    x: (seq, batch, Cin) in its native dtype (f32 or bf16).
    Either pass raw (weight, bias, lora_A, lora_B) or a cached `prepared` tuple
    from prepare_merged_params().
    """
    if prepared is None:
        prepared = prepare_merged_params(weight, bias, lora_A, lora_B,
                                         lora_alpha=lora_alpha, r=r)
    w_bf16, bias2d, cout = prepared
    cin, cout_p = w_bf16.shape

    seq, batch, cin_x = x.shape
    assert cin_x == cin, (cin_x, cin)
    M = seq * batch
    x2d = x.reshape(M, cin)                       # native dtype, no cast / no pad

    x_bytes = jnp.dtype(x.dtype).itemsize
    out_bytes = x_bytes

    vmem_limit, resident_thresh = _vmem_budgets()
    if vmem_limit_bytes is not None:
        vmem_limit = int(vmem_limit_bytes)

    def total_bytes(tm_, tn_, n_w_bufs):
        return (2 * tm_ * cin * x_bytes           # x tiles (double buffered)
                + n_w_bufs * cin * tn_ * 2        # bf16 weight tiles
                + 2 * tn_ * 4                     # bias tiles
                + 2 * tm_ * tn_ * out_bytes       # output tiles (double buffered)
                + tm_ * cin * 2)                  # bf16 activation scratch

    # --- resident-weight decision (generation-aware) --------------------------
    tm_min = M if M <= 16 else 16
    resident = (not force_streamed
                and 2 * cin * cout_p * 2 <= resident_thresh
                and total_bytes(tm_min, cout_p, 2) <= vmem_limit)

    if resident:
        tn_eff = cout_p
        n_w_bufs = 2
    else:
        tn_eff = min(_round_up(max(int(tn), 128), 128), cout_p)
        while cout_p % tn_eff != 0:               # cout_p is a multiple of 128
            tn_eff -= 128
        n_w_bufs = 3

    # --- M tiling: big tiles, multiple of 16 (bf16 sublane packing) -----------
    if M <= 16:
        tm_eff = M
    elif M <= tm and total_bytes(M, tn_eff, n_w_bufs) <= vmem_limit:
        tm_eff = M                                # single exact tile, no ragged edge
    else:
        tm_eff = min(_round_up(min(int(tm), M), 16), _round_up(M, 16))
        while tm_eff > 16 and total_bytes(tm_eff, tn_eff, n_w_bufs) > vmem_limit:
            tm_eff = max(16, _round_up(tm_eff // 2, 16))

    m_tiles = pl.cdiv(M, tm_eff)
    out_shape = jax.ShapeDtypeStruct((M, cout_p), x.dtype)

    if resident:
        grid = (m_tiles,)
        in_specs = [
            pl.BlockSpec((tm_eff, cin), lambda i: (i, 0)),       # x tile
            pl.BlockSpec((cin, cout_p), lambda i: (0, 0)),       # weight, resident
            pl.BlockSpec((1, cout_p), lambda i: (0, 0)),         # bias, resident
        ]
        out_specs = pl.BlockSpec((tm_eff, cout_p), lambda i: (i, 0))
        scratch_shapes = []
        kernel = _kernel_resident
        dim_semantics = ("parallel",)
    else:
        n_tiles = cout_p // tn_eff
        grid = (m_tiles, n_tiles)
        in_specs = [
            pl.BlockSpec((tm_eff, cin), lambda i, j: (i, 0)),    # x tile
            _make_weight_spec(cin, tn_eff, streamed=True),       # weight tile
            pl.BlockSpec((1, tn_eff), lambda i, j: (0, j)),      # bias tile
        ]
        out_specs = pl.BlockSpec((tm_eff, tn_eff), lambda i, j: (i, j))
        scratch_shapes = [pltpu.VMEM((tm_eff, cin), jnp.bfloat16)]  # act cache
        kernel = _kernel_streamed
        dim_semantics = ("parallel", "arbitrary")

    out2d = pl.pallas_call(
        kernel,
        out_shape=out_shape,
        grid_spec=pltpu.PrefetchScalarGridSpec(
            num_scalar_prefetch=0,
            grid=grid,
            in_specs=in_specs,
            out_specs=out_specs,
            scratch_shapes=scratch_shapes,
        ),
        compiler_params=pltpu.CompilerParams(
            dimension_semantics=dim_semantics,
            vmem_limit_bytes=int(vmem_limit),
        ),
    )(x2d, w_bf16, bias2d)

    if cout_p != cout:
        out2d = out2d[:, :cout]
    return out2d.reshape(seq, batch, cout)


# ----------------------------- references --------------------------------------

def _reference_unmerged_f32(x, weight, bias, lora_A, lora_B, *, lora_alpha, r):
    """Pure f32 reference mirroring the PyTorch module's unmerged LoRA forward."""
    seq, batch, cin = x.shape
    act = _swooshl_f32(x.reshape(-1, cin).astype(jnp.float32))
    main = act @ weight.T.astype(jnp.float32) + bias.astype(jnp.float32)
    lora = (act @ lora_A.T.astype(jnp.float32)) @ lora_B.T.astype(jnp.float32)
    out = main + lora * (float(lora_alpha) / float(r))
    return out.reshape(seq, batch, -1)


def _reference_bf16_merged(x, weight, bias, lora_A, lora_B, *, lora_alpha, r):
    """Reference mirroring the kernel numerics (merged weight, bf16 MXU, f32 acc)."""
    seq, batch, cin = x.shape
    scaling = float(lora_alpha) / float(r)
    w_eff = weight.astype(jnp.float32) + (lora_B.astype(jnp.float32)
                                          @ lora_A.astype(jnp.float32)) * scaling
    act = _swooshl_f32(x.reshape(-1, cin).astype(jnp.float32))
    out = jnp.dot(act.astype(jnp.bfloat16), w_eff.T.astype(jnp.bfloat16),
                  preferred_element_type=jnp.float32) + bias.astype(jnp.float32)
    return out.reshape(seq, batch, -1)


if __name__ == "__main__":
    # Small module hyper-parameters consistent with the module's __init__.
    in_channels = 32
    out_channels = 192     # exercises Cout padding 192 -> 256
    r = 4
    lora_alpha = 2
    initial_scale = 1.0
    seq, batch = 8, 2

    key = jax.random.PRNGKey(0)
    k_x, k_w, k_b, k_a, k_lb = jax.random.split(key, 5)

    # Input (seq, batch, Cin) -- zipformer channels-last convention.
    x = jax.random.normal(k_x, (seq, batch, in_channels), dtype=jnp.float32)

    # Parameters (shapes / init matching ScaledLinear_lora.__init__).
    bound = 1.0 / math.sqrt(in_channels)
    weight = jax.random.uniform(k_w, (out_channels, in_channels),
                                minval=-bound, maxval=bound) * initial_scale
    bias = jax.random.uniform(k_b, (out_channels,),
                              minval=-0.1 * initial_scale, maxval=0.1 * initial_scale)
    lora_A = jax.random.uniform(k_a, (r, in_channels), minval=-bound, maxval=bound)
    lora_B = jax.random.uniform(k_lb, (out_channels, r), minval=-0.01, maxval=0.01)

    # One-off weight prep (per weight update), hoisted out of the forward path.
    prepared = prepare_merged_params(weight, bias, lora_A, lora_B,
                                     lora_alpha=lora_alpha, r=r)

    # 1) Resident-weight path (weight fits VMEM at these shapes; 1-D grid).
    out = activation_dropout_linear_lora(x, prepared=prepared)
    out = jax.block_until_ready(out)
    assert out.shape == (seq, batch, out_channels), out.shape

    # 2) Streamed-weight + activation-cache path (forced, to exercise it).
    out_s = activation_dropout_linear_lora(x, prepared=prepared,
                                           force_streamed=True, tn=128)
    out_s = jax.block_until_ready(out_s)
    assert out_s.shape == (seq, batch, out_channels), out_s.shape
    assert jnp.allclose(out, out_s, atol=1e-5, rtol=1e-5), \
        float(jnp.max(jnp.abs(out - out_s)))

    # Tight check against a reference mirroring the kernel numerics.
    ref_bf16 = _reference_bf16_merged(x, weight, bias, lora_A, lora_B,
                                      lora_alpha=lora_alpha, r=r)
    assert jnp.allclose(out, ref_bf16, atol=1e-3, rtol=1e-3), \
        float(jnp.max(jnp.abs(out - ref_bf16)))

    # Loose check against the exact f32 unmerged-LoRA math of the PyTorch module.
    ref_f32 = _reference_unmerged_f32(x, weight, bias, lora_A, lora_B,
                                      lora_alpha=lora_alpha, r=r)
    assert jnp.allclose(out, ref_f32, atol=2e-2, rtol=2e-2), \
        float(jnp.max(jnp.abs(out - ref_f32)))

    print("KERNEL_OK")
</pallas_src>

<mosaic_0001>
module attributes {stable_mosaic.version = 11 : i64} {
  func.func @_kernel_resident(%arg0: i32, %arg1: memref<16x32xf32, #tpu.memory_space<vmem>>, %arg2: memref<32x256xbf16, #tpu.memory_space<vmem>>, %arg3: memref<1x256xf32, #tpu.memory_space<vmem>>, %arg4: memref<16x256xf32, #tpu.memory_space<vmem>>) attributes {dimension_semantics = [#tpu.dimension_semantics<parallel>], iteration_bounds = array<i64: 1>, scalar_prefetch = 0 : i64, scratch_operands = 0 : i64, tpu.core_type = #tpu.core_type<tc>, window_params = [{transform_indices = @transform_0, window_bounds = array<i64: 16, 32>}, {pipeline_mode = #tpu.pipeline_mode<synchronous>, transform_indices = @transform_1, window_bounds = array<i64: 32, 256>}, {pipeline_mode = #tpu.pipeline_mode<synchronous>, transform_indices = @transform_2, window_bounds = array<i64: 1, 256>}, {transform_indices = @transform_3, window_bounds = array<i64: 16, 256>}]} {
    %c0 = arith.constant 0 : index
    %c0_0 = arith.constant 0 : index
    %0 = vector.load %arg1[%c0, %c0_0] : memref<16x32xf32, #tpu.memory_space<vmem>>, vector<16x32xf32>
    %cst = arith.constant 4.000000e+00 : f32
    %1 = vector.broadcast %cst : f32 to vector<16x32xf32>
    %2 = arith.subf %0, %1 : vector<16x32xf32>
    %cst_1 = arith.constant 0.000000e+00 : f32
    %3 = vector.broadcast %cst_1 : f32 to vector<16x32xf32>
    %4 = arith.maximumf %2, %3 : vector<16x32xf32>
    %5 = math.absf %2 : vector<16x32xf32>
    %cst_2 = arith.constant 0.000000e+00 : f32
    %6 = vector.broadcast %cst_2 : f32 to vector<16x32xf32>
    %7 = arith.subf %6, %5 : vector<16x32xf32>
    %8 = math.exp %7 : vector<16x32xf32>
    %9 = math.log1p %8 : vector<16x32xf32>
    %10 = arith.addf %4, %9 : vector<16x32xf32>
    %cst_3 = arith.constant 8.000000e-02 : f32
    %11 = vector.broadcast %cst_3 : f32 to vector<16x32xf32>
    %12 = arith.mulf %11, %0 : vector<16x32xf32>
    %13 = arith.subf %10, %12 : vector<16x32xf32>
    %cst_4 = arith.constant 3.500000e-02 : f32
    %14 = vector.broadcast %cst_4 : f32 to vector<16x32xf32>
    %15 = arith.subf %13, %14 : vector<16x32xf32>
    %16 = arith.truncf %15 : vector<16x32xf32> to vector<16x32xbf16>
    %c0_5 = arith.constant 0 : index
    %c0_6 = arith.constant 0 : index
    %17 = vector.load %arg2[%c0_5, %c0_6] : memref<32x256xbf16, #tpu.memory_space<vmem>>, vector<32x256xbf16>
    %cst_7 = arith.constant dense<0.000000e+00> : vector<16x256xf32>
    %18 = tpu.matmul %16, %17, %cst_7 {dimension_numbers = #tpu.dot_dimension_numbers<[1], [0], [0], [1], [0, 0, 1, 1], [], []>} : vector<16x32xbf16>, vector<32x256xbf16>, vector<16x256xf32> -> vector<16x256xf32>
    %c0_8 = arith.constant 0 : index
    %c0_9 = arith.constant 0 : index
    %19 = vector.load %arg3[%c0_8, %c0_9] : memref<1x256xf32, #tpu.memory_space<vmem>>, vector<1x256xf32>
    %20 = vector.broadcast %19 : vector<1x256xf32> to vector<16x256xf32>
    %21 = arith.addf %18, %20 : vector<16x256xf32>
    %c0_10 = arith.constant 0 : index
    %c0_11 = arith.constant 0 : index
    %22 = vector.load %arg4[%c0_10, %c0_11] : memref<16x256xf32, #tpu.memory_space<vmem>>, vector<16x256xf32>
    tpu.vector_store %arg4[%c0_10, %c0_11], %21 {strides = array<i32>} : memref<16x256xf32, #tpu.memory_space<vmem>>, vector<16x256xf32>,
    return
  }
  func.func @transform_0(%arg0: i32) -> (i32, i32) {
    %c0_i32 = arith.constant 0 : i32
    %c0_i32_0 = arith.constant 0 : i32
    return %arg0, %c0_i32 : i32, i32
  }
  func.func @transform_1(%arg0: i32) -> (i32, i32) {
    %c0_i32 = arith.constant 0 : i32
    %c0_i32_0 = arith.constant 0 : i32
    %c0_i32_1 = arith.constant 0 : i32
    return %c0_i32, %c0_i32_0 : i32, i32
  }
  func.func @transform_2(%arg0: i32) -> (i32, i32) {
    %c0_i32 = arith.constant 0 : i32
    %c0_i32_0 = arith.constant 0 : i32
    %c0_i32_1 = arith.constant 0 : i32
    return %c0_i32, %c0_i32_0 : i32, i32
  }
  func.func @transform_3(%arg0: i32) -> (i32, i32) {
    %c0_i32 = arith.constant 0 : i32
    %c0_i32_0 = arith.constant 0 : i32
    return %arg0, %c0_i32 : i32, i32
  }
}

</mosaic_0001>

<llo_original>
// kernel: tpu_custom_call.1
$region0: #{tpu_custom_call.1}
  #allocation0 [shape = 'u32[]', space=smem, size = 0x4, offset = 0x4, fixed_abs, tag = 'smem constant byte address 0x4 - core index']
  #allocation1 [shape = 'u32[144,128]{1,0:T(1,128)}', space=vmem, size = 0x12000, scoped, tag = 'internal scratch']
  %s0 = inlined_call_operand.hbm [shape: f32[16,32], index: 0, kind: input, shape index: {}]
  %s1 = inlined_call_operand.hbm [shape: bf16[32,256], index: 1, kind: input, shape index: {}]
  %s2 = inlined_call_operand.vmem [shape: f32[1,256], index: 2, kind: input, shape index: {}]
  %s3 = inlined_call_operand.hbm [shape: f32[16,256], index: 3, kind: output, shape index: {}]
  %s4 = sld [smem:[#allocation0]]
  $region30: #{tpu_custom_call.1} parent=0
    _
  %s6 = ssub.s32 1, %s4
  %s7 = scalar_select 0, %s6, %s4
  $region1: #{tpu_custom_call.1} parent=0
    #allocation2 [shape = 'u8[8192]{0}', space=vmem, size = 0x2000, scoped, tag = 'input window, operand 0, single buffered']
    #allocation3 [shape = 's32[1]{0}', space=sflag, size = 0x4, scoped, tag = 'scoped memory for tpu_custom_call.1']
    #allocation4 [shape = 's32[1]{0}', space=sflag, size = 0x4, scoped, tag = 'scoped memory for tpu_custom_call.1']
    #allocation5 [shape = 'u8[16384]{0}', space=vmem, size = 0x4000, scoped, tag = 'input window, operand 1, single buffered']
    #allocation6 [shape = 's32[1]{0}', space=sflag, size = 0x4, scoped, tag = 'scoped memory for tpu_custom_call.1']
    #allocation7 [shape = 'u8[16384]{0}', space=vmem, size = 0x4000, scoped, tag = 'output window, operand 0, single buffered']
    %8 = vsyncpa [#allocation3], 0
    %9 = vsyncpa [#allocation6], 0
    %10 = vsyncpa [#allocation4], 0
    // Predicated region
    $region2: #{tpu_custom_call.1} parent=1 // pred_check
      _
    $region3: #{tpu_custom_call.1} parent=1 // pred_check_branch
      %12 = sbr.rel (0) target = $region5
    $region4: #{tpu_custom_call.1} parent=1 // pred_region
      %s14 = ssub.s32 256, 256
      %15 = vsyncadd [#allocation3], %s14
      %s16 = sshll.u32 [#allocation2], 4
      %s17 = int_to_ptr.vmem [resolvable:$true] %s16
      %22 = dma.hbm_to_vmem [thread:$0]  %s0, 256, %s17, [#allocation3], 128, 128, 8
    $region5: #{tpu_custom_call.1} parent=1 // pred_fallthru
      _
    // Predicated region
    $region6: #{tpu_custom_call.1} parent=1 // pred_check
      _
    $region7: #{tpu_custom_call.1} parent=1 // pred_check_branch
      %24 = sbr.rel (0) target = $region9
    $region8: #{tpu_custom_call.1} parent=1 // pred_region
      %s26 = ssub.s32 512, 512
      %27 = vsyncadd [#allocation6], %s26
      %s28 = sshll.u32 [#allocation5], 4
      %s29 = int_to_ptr.vmem [resolvable:$true] %s28
      %34 = dma.hbm_to_vmem [thread:$0]  %s1, 512, %s29, [#allocation6], 128, 128, 8
    $region9: #{tpu_custom_call.1} parent=1 // pred_fallthru
      _
    // Predicated region
    $region10: #{tpu_custom_call.1} parent=1 // pred_check
      _
    $region11: #{tpu_custom_call.1} parent=1 // pred_check_branch
      %36 = sbr.rel (0) target = $region13
    $region12: #{tpu_custom_call.1} parent=1 // pred_region
      _
    $region13: #{tpu_custom_call.1} parent=1 // pred_fallthru
      _
    // Predicated region
    $region14: #{tpu_custom_call.1} parent=1 // pred_check
      _
    $region15: #{tpu_custom_call.1} parent=1 // pred_check_branch
      %38 = sbr.rel (0) target = $region17
    $region16: #{tpu_custom_call.1} parent=1 // pred_region
      %39 = dma.done [#allocation3], 256
    $region17: #{tpu_custom_call.1} parent=1 // pred_fallthru
      _
    // Predicated region
    $region18: #{tpu_custom_call.1} parent=1 // pred_check
      _
    $region19: #{tpu_custom_call.1} parent=1 // pred_check_branch
      %41 = sbr.rel (0) target = $region21
    $region20: #{tpu_custom_call.1} parent=1 // pred_region
      %42 = dma.done [#allocation6], 512
    $region21: #{tpu_custom_call.1} parent=1 // pred_fallthru
      _
    %v44 = vld [vmem:[#allocation2] sm:$0xff]
    %v45 = vld [vmem:[#allocation2 + $0x8] sm:$0xff]
    %v46 = vsub.f32 %v44, 4.0
    %v47 = vsub.f32 %v45, 4.0
    %v48 = vmax.f32 %v46, 0.0
    %v49 = vmax.f32 %v47, 0.0
    %v50 = vand.u32 2147483647, %v46
    %v51 = vand.u32 2147483647, %v47
    %v52 = vsub.f32 0.0, %v50
    %v53 = vsub.f32 0.0, %v51
    %v54 = vmul.f32 %v52, 1.442695
    %v55 = vpow.pop %v54
    %v56 = vmul.f32 %v53, 1.442695
    %v57 = vpow.pop %v56
    %v58 = vadd.f32 %v55, 1.0
    %v59 = vlog2.pop %v58
    %v60 = vmul.f32 %v59, 0.6931472
    %v61 = vmul.f32 -0.5, %v55
    %v62 = vadd.f32 %v61, 1.0
    %v63 = vmul.f32 %v62, %v55
    %v64 = vand.u32 2147483647, %v55
    %vm65 = vcmp.lt.f32.partialorder %v64, 0.0004427343
    %v66 = vsel %vm65, %v63, %v60
    %v67 = vadd.f32 %v57, 1.0
    %v68 = vlog2.pop %v67
    %v69 = vmul.f32 %v68, 0.6931472
    %v70 = vmul.f32 -0.5, %v57
    %v71 = vadd.f32 %v70, 1.0
    %v72 = vmul.f32 %v71, %v57
    %v73 = vand.u32 2147483647, %v57
    %vm74 = vcmp.lt.f32.partialorder %v73, 0.0004427343
    %v75 = vsel %vm74, %v72, %v69
    %v76 = vadd.f32 %v48, %v66
    %v77 = vadd.f32 %v49, %v75
    %v78 = vmul.f32 %v44, 0.08
    %v79 = vmul.f32 %v45, 0.08
    %v80 = vsub.f32 %v76, %v78
    %v81 = vsub.f32 %v77, %v79
    %v82 = vsub.f32 %v80, 0.035
    %v83 = vsub.f32 %v81, 0.035
    %v84 = vpack.c.bf16 %v83, %v82
    %v85 = vld [vmem:[#allocation5] sm:$0xff]
    %v86 = vld [vmem:[#allocation5 + $0x8] sm:$0xff]
    %v87 = vld [vmem:[#allocation5 + $0x10] sm:$0xff]
    %v88 = vld [vmem:[#allocation5 + $0x18] sm:$0xff]
    %v89 = vld [vmem:[%s2] sm:$0x3]
    %v91 = vlaneseq
    %v92 = vshrl.u32 %v91, 7
    %v93 = vsub.s32 0, %v92
    %v94 = vrot.slane %v89, %v93
    %v95 = vlaneseq
    %v96 = vshrl.u32 %v95, 7
    %v97 = vsub.s32 1, %v96
    %v98 = vrot.slane %v89, %v97
    %v105 = vunpack.c.l.b16 %v85
    %v106 = vunpack.c.h.b16 %v85
    %v107 = vunpack.c.l.b16 %v86
    %v108 = vunpack.c.h.b16 %v86
    %v109 = vunpack.c.l.b16 %v87
    %v110 = vunpack.c.h.b16 %v87
    %v111 = vunpack.c.l.b16 %v88
    %v112 = vunpack.c.h.b16 %v88
    %v113 = vpack.c.b16 %v107, %v105
    %v114 = vpack.c.b16 %v108, %v106
    %v115 = vpack.c.b16 %v111, %v109
    %v116 = vpack.c.b16 %v112, %v110
    %vm121 = vcmask 261120
    %v123 = vsel %vm121, %v84, 0
    %125 = vmatprep.subr.bf16.mxu0 %v114
    %126 = vmatpush1.bf16.msra.mxu0 %v113
    %127 = vmatprep.subr.bf16.mxu0 %v116
    %128 = vmatpush1.bf16.msra.mxu0 %v115
    %129 = vmatprep.subr.bf16.mxu0 0
    %130 = vmatpush1.bf16.msra.mxu0 0
    %131 = vmatprep.subr.bf16.mxu0 0
    %132 = vmatpush1.bf16.msra.mxu0 0
    %133 = vmatprep.subr.bf16.mxu0 0
    %134 = vmatpush1.bf16.msra.mxu0 0
    %135 = vmatprep.subr.bf16.mxu0 0
    %136 = vmatpush1.bf16.msra.mxu0 0
    %137 = vmatprep.subr.bf16.mxu0 0
    %138 = vmatpush1.bf16.msra.mxu0 0
    %139 = vmatprep.subr.bf16.mxu0 0
    %140 = vmatpush1.bf16.msra.mxu0 0
    %141 = vmatprep.subr.bf16.mxu0 0
    %142 = vmatpush1.bf16.msra.mxu0 0
    %143 = vmatprep.subr.bf16.mxu0 0
    %144 = vmatpush1.bf16.msra.mxu0 0
    %145 = vmatprep.subr.bf16.mxu0 0
    %146 = vmatpush1.bf16.msra.mxu0 0
    %147 = vmatprep.subr.bf16.mxu0 0
    %148 = vmatpush1.bf16.msra.mxu0 0
    %149 = vmatprep.subr.bf16.mxu0 0
    %150 = vmatpush1.bf16.msra.mxu0 0
    %151 = vmatprep.subr.bf16.mxu0 0
    %152 = vmatpush1.bf16.msra.mxu0 0
    %153 = vmatprep.subr.bf16.mxu0 0
    %154 = vmatpush1.bf16.msra.mxu0 0
    %155 = vmatprep.subr.bf16.mxu0 0
    %156 = vmatpush1.bf16.msra.mxu0 0
    %157 = vmatprep.mubr.bf16.mxu0 0
    %158 = vmatmul.mubr.bf16.gmra.mrb[0].mxu0 %v123
    %v159 = vpop.f32.mrb[0].mxu0
    %v160 = vadd.f32 %v94, %v159
    %v161 = vpop.f32.mrb[0].mxu0
    %v162 = vadd.f32 %v98, %v161
    %v163 = vpop.f32.mrb[0].mxu0
    %v164 = vadd.f32 %v94, %v163
    %v165 = vpop.f32.mrb[0].mxu0
    %v166 = vadd.f32 %v98, %v165
    %167 = vdwg.mxu0
    %168 = vst [vmem:[#allocation7] sm:$0xff] %v160
    %169 = vst [vmem:[#allocation7 + $0x8] sm:$0xff] %v162
    %170 = vst [vmem:[#allocation7 + $0x10] sm:$0xff] %v164
    %171 = vst [vmem:[#allocation7 + $0x18] sm:$0xff] %v166
    // Predicated region
    $region22: #{tpu_custom_call.1} parent=1 // pred_check
      _
    $region23: #{tpu_custom_call.1} parent=1 // pred_check_branch
      %173 = sbr.rel (0) target = $region25
    $region24: #{tpu_custom_call.1} parent=1 // pred_region
      %s175 = ssub.s32 512, 512
      %176 = vsyncadd [#allocation4], %s175
      %s177 = sshll.u32 [#allocation7], 4
      %s178 = int_to_ptr.vmem [resolvable:$true] %s177
      %183 = dma.vmem_to_hbm [thread:$0]  %s178, 512, %s3, [#allocation4], 256, 256, 16
    $region25: #{tpu_custom_call.1} parent=1 // pred_fallthru
      _
    // Predicated region
    $region26: #{tpu_custom_call.1} parent=1 // pred_check
      _
    $region27: #{tpu_custom_call.1} parent=1 // pred_check_branch
      %185 = sbr.rel (0) target = $region29
    $region28: #{tpu_custom_call.1} parent=1 // pred_region
      %186 = dma.done [#allocation4], 512
    $region29: #{tpu_custom_call.1} parent=1 // pred_fallthru
      _
    %187 = vsyncpa [#allocation3], 1
    %188 = vsyncpa [#allocation6], 1
    %189 = vsyncpa [#allocation4], 1

</llo_original>
